<compile_context>
chip_gen: v6e
topology: v6e:2x2x1
jax: 0.10.0
libtpu: 0.0.40
codegen_flags: <defaults>
</compile_context>

<pallas_src>
import numpy as np
import jax
import jax.numpy as jnp
from jax import lax
from jax.experimental import pallas as pl
from jax.experimental.pallas import tpu as pltpu


# ----------------------------- tiling helpers --------------------------------

def _vmem_limit(block_bytes):
    """Explicit scoped-VMEM limit from actual block sizes (double-buffered) + headroom."""
    return int(min(64 << 20, max(16 << 20, 2 * block_bytes + (2 << 20))))


def _pick_row_tile(R):
    """Row tile for the flattened (T*B) projection GEMM. Full if small, else 512 + pad."""
    if R <= 1024:
        return R, R
    tile = 512
    Rp = ((R + tile - 1) // tile) * tile
    return tile, Rp


def _pick_col_tile(G4):
    """Gate-column tile (multiple of 128 or full) so big 8H models fit scoped VMEM."""
    if G4 <= 2048:
        return G4
    for ct in (2048, 1024, 512, 256, 128):
        if G4 % ct == 0:
            return ct
    return G4


def _pick_time_tile(T, B, H, gx_bytes_per_elem=2, budget_bytes=4 << 20):
    """Largest divisor of T whose double-buffered gx tiles (both dirs) fit the budget.

    TODO(synk): halve budget_bytes on v7x (64 MiB VMEM); raise vmem_limit on v5e instead.
    """
    per_step = 2 * 2 * B * (4 * H) * gx_bytes_per_elem   # 2 dirs x 2 buffers
    cap = max(1, budget_bytes // max(per_step, 1))
    tt = 1
    for d in range(1, T + 1):
        if T % d == 0 and d <= cap:
            tt = d
    return tt


# ------------------------- input-projection kernel ---------------------------

def _make_proj_kernel(n_chunks):
    """gx_fwd / gx_bwd = sum_k x_k @ W_k + b, for one (row_tile, col_tile) block."""
    def kernel(*refs):
        xs = refs[0:n_chunks]
        wfs = refs[n_chunks:2 * n_chunks]
        wbs = refs[2 * n_chunks:3 * n_chunks]
        bf_ref = refs[3 * n_chunks]
        bb_ref = refs[3 * n_chunks + 1]
        gf_ref = refs[3 * n_chunks + 2]
        gb_ref = refs[3 * n_chunks + 3]
        gf = bf_ref[...]                                   # (1, ct) f32, broadcasts
        gb = bb_ref[...]
        for x_r, wf_r, wb_r in zip(xs, wfs, wbs):
            x = x_r[...]                                   # bf16
            gf = gf + jnp.dot(x, wf_r[...], preferred_element_type=jnp.float32)
            gb = gb + jnp.dot(x, wb_r[...], preferred_element_type=jnp.float32)
        gf_ref[...] = gf.astype(gf_ref.dtype)
        gb_ref[...] = gb.astype(gb_ref.dtype)
    return kernel


def input_projection(x_chunks, wf_chunks, wb_chunks, b_f, b_b, out_dtype=jnp.bfloat16):
    """Hoisted input GEMM for one layer (both directions), row/column tiled.

    x_chunks:  list of (R, D_k) bf16 arrays (feature chunks of the layer input).
    wf_chunks: list of (D_k, 4H) bf16 fwd-direction weight row-chunks ([i,f,g,o] cols).
    wb_chunks: same for the bwd direction.  b_f/b_b: (1, 4H) f32 combined biases.
    Returns gx_fwd, gx_bwd: (R, 4H) bf16, natural time order.
    """
    R = x_chunks[0].shape[0]
    G4 = wf_chunks[0].shape[1]
    n = len(x_chunks)
    row_tile, Rp = _pick_row_tile(R)
    ct = _pick_col_tile(G4)
    if Rp != R:  # pad rows so the grid divides evenly (padded rows are never consumed)
        x_chunks = [jnp.pad(xc, ((0, Rp - R), (0, 0))) for xc in x_chunks]
    grid = (Rp // row_tile, G4 // ct)

    in_specs = (
        [pl.BlockSpec((row_tile, xc.shape[1]), lambda i, j: (i, 0)) for xc in x_chunks]
        + [pl.BlockSpec((w.shape[0], ct), lambda i, j: (0, j)) for w in wf_chunks]
        + [pl.BlockSpec((w.shape[0], ct), lambda i, j: (0, j)) for w in wb_chunks]
        + [pl.BlockSpec((1, ct), lambda i, j: (0, j)),
           pl.BlockSpec((1, ct), lambda i, j: (0, j))])
    out_specs = (pl.BlockSpec((row_tile, ct), lambda i, j: (i, j)),
                 pl.BlockSpec((row_tile, ct), lambda i, j: (i, j)))
    out_shape = (jax.ShapeDtypeStruct((Rp, G4), out_dtype),
                 jax.ShapeDtypeStruct((Rp, G4), out_dtype))

    blk_bytes = (sum(row_tile * xc.shape[1] * xc.dtype.itemsize for xc in x_chunks)
                 + sum(w.shape[0] * ct * w.dtype.itemsize for w in wf_chunks + wb_chunks)
                 + 2 * ct * 4
                 + 2 * row_tile * ct * jnp.dtype(out_dtype).itemsize)

    gf, gb = pl.pallas_call(
        _make_proj_kernel(n),
        out_shape=out_shape,
        grid=grid,
        in_specs=in_specs,
        out_specs=out_specs,
        compiler_params=pltpu.CompilerParams(
            dimension_semantics=("parallel", "parallel"),
            vmem_limit_bytes=_vmem_limit(blk_bytes)),
    )(*x_chunks, *wf_chunks, *wb_chunks, b_f, b_b)
    if Rp != R:
        gf, gb = gf[:R], gb[:R]
    return gf, gb


# ---------------------------- recurrence kernel -------------------------------

def _make_recurrence_kernel(tt, H, T, reduce_mode):
    """Fused fwd+bwd LSTM recurrence over one time tile (tt steps).

    gxf_ref: (tt, B, 4H) bf16 fwd input gates, rows = global steps of this tile.
    gxb_ref: (tt, B, 4H) bf16 bwd input gates, tile fetched time-reversed by the in_spec
             (row tt-1-s holds the gates for global step s of this tile).
    whf/whb: (H, 4H) bf16 recurrent weights per direction.
    Outputs: either out_f/out_b (tt, B, H) hidden tiles (bwd written at its true time row
             via a reversed out_spec) or a (B, 2H) f32 sum/mean accumulator.
    Scratch: h_f, h_b, c_f, c_b (B, H) f32 carried across grid steps.
    """
    unroll = min(tt, 8)
    reduce_out = reduce_mode is not None

    def kernel(gxf_ref, gxb_ref, whf_ref, whb_ref, *rest):
        if reduce_out:
            out_ref = rest[0]
            hf_s, hb_s, cf_s, cb_s = rest[1:]
        else:
            of_ref, ob_ref = rest[0], rest[1]
            hf_s, hb_s, cf_s, cb_s = rest[2:]

        tile_i = pl.program_id(0)
        n_tiles = pl.num_programs(0)

        @pl.when(tile_i == 0)
        def _init():
            hf_s[...] = jnp.zeros_like(hf_s)
            hb_s[...] = jnp.zeros_like(hb_s)
            cf_s[...] = jnp.zeros_like(cf_s)
            cb_s[...] = jnp.zeros_like(cb_s)
            if reduce_out:
                out_ref[...] = jnp.zeros_like(out_ref)

        # Hoisted: recurrent weights stay resident in vregs/VMEM for the whole tile.
        whf = whf_ref[...]
        whb = whb_ref[...]
        B = hf_s.shape[0]

        def lstm_step(s, carry):
            if reduce_out:
                h_f, h_b, c_f, c_b, acc_f, acc_b = carry
            else:
                h_f, h_b, c_f, c_b = carry
            # One contiguous, fully-used gx load per direction (no select, no waste).
            gf = gxf_ref[s].astype(jnp.float32)             # (B, 4H)
            gb = gxb_ref[tt - 1 - s].astype(jnp.float32)    # bwd gates for this step
            # Two zero-free bf16 MXU matmuls (independent -> scheduler interleaves them).
            zf = jnp.dot(h_f.astype(jnp.bfloat16), whf,
                         preferred_element_type=jnp.float32) + gf
            zb = jnp.dot(h_b.astype(jnp.bfloat16), whb,
                         preferred_element_type=jnp.float32) + gb
            # PyTorch gate order i, f, g, o (lane-aligned for real sizes where H % 128 == 0).
            i_f = jax.nn.sigmoid(zf[:, 0:H]);        i_b = jax.nn.sigmoid(zb[:, 0:H])
            f_f = jax.nn.sigmoid(zf[:, H:2 * H]);    f_b = jax.nn.sigmoid(zb[:, H:2 * H])
            g_f = jnp.tanh(zf[:, 2 * H:3 * H]);      g_b = jnp.tanh(zb[:, 2 * H:3 * H])
            o_f = jax.nn.sigmoid(zf[:, 3 * H:4 * H]); o_b = jax.nn.sigmoid(zb[:, 3 * H:4 * H])
            c_f = f_f * c_f + i_f * g_f
            c_b = f_b * c_b + i_b * g_b
            h_f = o_f * jnp.tanh(c_f)
            h_b = o_b * jnp.tanh(c_b)
            if reduce_out:
                # Fused sum over time, carried in vregs.
                return h_f, h_b, c_f, c_b, acc_f + h_f, acc_b + h_b
            # Full-width stores; bwd row goes to its true time position in this
            # (time-reversed) output tile -> both buffers end up in natural time order.
            of_ref[s] = h_f.astype(of_ref.dtype)
            ob_ref[tt - 1 - s] = h_b.astype(ob_ref.dtype)
            return h_f, h_b, c_f, c_b

        init = (hf_s[...], hb_s[...], cf_s[...], cb_s[...])
        if reduce_out:
            zero = jnp.zeros((B, H), jnp.float32)
            init = init + (zero, zero)
        final = lax.fori_loop(0, tt, lstm_step, init, unroll=unroll)

        # Spill recurrent state to scratch only once per tile.
        hf_s[...] = final[0]
        hb_s[...] = final[1]
        cf_s[...] = final[2]
        cb_s[...] = final[3]
        if reduce_out:
            out_ref[...] += jnp.concatenate([final[4], final[5]], axis=-1)
            if reduce_mode == 'mean':
                @pl.when(tile_i == n_tiles - 1)
                def _finalize():
                    out_ref[...] = out_ref[...] * jnp.float32(1.0 / T)

    return kernel


def bilstm_layer(gxf, gxb, whh_f, whh_b, reduce_mode=None):
    """Fused bidirectional recurrence for one layer, time-tiled grid ("arbitrary").

    gxf/gxb: (T, B, 4H) bf16 precomputed input gates (natural time order).
    whh_f/whh_b: (H, 4H) bf16 recurrent weights.
    Returns (out_f, out_b) each (T, B, H) bf16, or a (B, 2H) f32 sum/mean over time.
    """
    T, B, G4 = gxf.shape
    H = G4 // 4
    tt = _pick_time_tile(T, B, H, gx_bytes_per_elem=gxf.dtype.itemsize)
    nT = T // tt
    kernel = _make_recurrence_kernel(tt, H, T, reduce_mode)

    in_specs = [
        pl.BlockSpec((tt, B, G4), lambda i: (i, 0, 0)),            # fwd gx tile
        pl.BlockSpec((tt, B, G4), lambda i: (nT - 1 - i, 0, 0)),   # bwd gx tile (reversed)
        pl.BlockSpec((H, G4), lambda i: (0, 0)),
        pl.BlockSpec((H, G4), lambda i: (0, 0)),
    ]
    if reduce_mode is None:
        out_shape = (jax.ShapeDtypeStruct((T, B, H), jnp.bfloat16),
                     jax.ShapeDtypeStruct((T, B, H), jnp.bfloat16))
        out_specs = (pl.BlockSpec((tt, B, H), lambda i: (i, 0, 0)),
                     pl.BlockSpec((tt, B, H), lambda i: (nT - 1 - i, 0, 0)))
        out_block_bytes = 2 * tt * B * H * 2
    else:
        out_shape = jax.ShapeDtypeStruct((B, 2 * H), jnp.float32)
        out_specs = pl.BlockSpec((B, 2 * H), lambda i: (0, 0))
        out_block_bytes = B * 2 * H * 4

    blk_bytes = (2 * tt * B * G4 * gxf.dtype.itemsize        # two gx tiles
                 + 2 * H * G4 * whh_f.dtype.itemsize         # recurrent weights
                 + out_block_bytes
                 + 4 * B * H * 4)                             # h/c scratch

    return pl.pallas_call(
        kernel,
        out_shape=out_shape,
        grid=(nT,),
        in_specs=in_specs,
        out_specs=out_specs,
        scratch_shapes=[pltpu.VMEM((B, H), jnp.float32) for _ in range(4)],
        compiler_params=pltpu.CompilerParams(
            dimension_semantics=("arbitrary",),
            vmem_limit_bytes=_vmem_limit(blk_bytes)),
    )(gxf, gxb, whh_f, whh_b)


# --------------------------- parameter init ----------------------------------

def init_lstm_reduce_params(key, d_input, d_hidden, n_lstm):
    """Deterministic init matching nn.LSTM parameter shapes (bidirectional).

    Per layer, per direction: w_ih (4H, d_in), w_hh (4H, H), b_ih (4H,), b_hh (4H,)
    with H = d_hidden // 2 and d_in = d_input for layer 0 else d_hidden (= 2H).
    """
    H = d_hidden // 2
    bound = 1.0 / np.sqrt(H)
    params = []
    keys = jax.random.split(key, n_lstm * 2 * 4)
    idx = 0
    for layer in range(n_lstm):
        d_in = d_input if layer == 0 else d_hidden
        layer_params = []
        for _direction in range(2):
            w_ih = jax.random.uniform(keys[idx], (4 * H, d_in), jnp.float32, -bound, bound); idx += 1
            w_hh = jax.random.uniform(keys[idx], (4 * H, H), jnp.float32, -bound, bound);    idx += 1
            b_ih = jax.random.uniform(keys[idx], (4 * H,), jnp.float32, -bound, bound);      idx += 1
            b_hh = jax.random.uniform(keys[idx], (4 * H,), jnp.float32, -bound, bound);      idx += 1
            layer_params.append((w_ih, w_hh, b_ih, b_hh))
        params.append(layer_params)
    return params


# ------------------------------ forward --------------------------------------

def lstm_reduce_forward(features, params, reduction='sum'):
    """features: (T, B, d_input) -> (B, d_hidden). Eval forward of LSTMReduce."""
    if reduction not in ('sum', 'mean'):
        raise ValueError(reduction)
    T, B, d_input = features.shape
    n_layers = len(params)

    # Layer input as a list of feature chunks (R, D_k) in bf16 (R = T*B); for layers > 0
    # these are the previous layer's fwd/bwd hidden buffers (no concat materialized).
    chunks = [features.astype(jnp.bfloat16).reshape(T * B, d_input)]
    out = None
    for li, (fwd_p, bwd_p) in enumerate(params):
        wf_ih, wf_hh, bf_ih, bf_hh = fwd_p
        wb_ih, wb_hh, bb_ih, bb_hh = bwd_p
        H = wf_hh.shape[1]
        G4 = 4 * H

        Wf = jnp.transpose(wf_ih).astype(jnp.bfloat16)        # (D_in, 4H), cols [i,f,g,o]
        Wb = jnp.transpose(wb_ih).astype(jnp.bfloat16)
        b_f = (bf_ih + bf_hh).astype(jnp.float32).reshape(1, G4)
        b_b = (bb_ih + bb_hh).astype(jnp.float32).reshape(1, G4)
        if len(chunks) == 1:
            wf_chunks, wb_chunks = [Wf], [Wb]
        else:  # input features ordered [fwd H | bwd H] -> split weight rows per chunk
            wf_chunks, wb_chunks = [Wf[:H], Wf[H:]], [Wb[:H], Wb[H:]]

        gf2d, gb2d = input_projection(chunks, wf_chunks, wb_chunks, b_f, b_b)
        gxf = gf2d.reshape(T, B, G4)
        gxb = gb2d.reshape(T, B, G4)

        whh_f = jnp.transpose(wf_hh).astype(jnp.bfloat16)     # (H, 4H)
        whh_b = jnp.transpose(wb_hh).astype(jnp.bfloat16)

        if li == n_layers - 1:
            out = bilstm_layer(gxf, gxb, whh_f, whh_b, reduce_mode=reduction)  # (B, 2H)
        else:
            out_f, out_b = bilstm_layer(gxf, gxb, whh_f, whh_b, reduce_mode=None)
            chunks = [out_f.reshape(T * B, H), out_b.reshape(T * B, H)]
    return out


# --------------------------- pure-JAX reference -------------------------------

def _ref_lstm_dir(x, w_ih, w_hh, b_ih, b_hh):
    T, B, _ = x.shape
    H = w_hh.shape[1]

    def step(carry, x_t):
        h, c = carry
        gates = x_t @ w_ih.T + h @ w_hh.T + b_ih + b_hh
        i_g = jax.nn.sigmoid(gates[:, :H])
        f_g = jax.nn.sigmoid(gates[:, H:2 * H])
        g_g = jnp.tanh(gates[:, 2 * H:3 * H])
        o_g = jax.nn.sigmoid(gates[:, 3 * H:])
        c = f_g * c + i_g * g_g
        h = o_g * jnp.tanh(c)
        return (h, c), h

    init = (jnp.zeros((B, H), jnp.float32), jnp.zeros((B, H), jnp.float32))
    _, hs = lax.scan(step, init, x)
    return hs


def _ref_forward(features, params, reduction='sum'):
    x = features.astype(jnp.float32)
    for layer_params in params:
        (wf_ih, wf_hh, bf_ih, bf_hh), (wb_ih, wb_hh, bb_ih, bb_hh) = layer_params
        fwd = _ref_lstm_dir(x, wf_ih, wf_hh, bf_ih, bf_hh)
        bwd = jnp.flip(_ref_lstm_dir(jnp.flip(x, 0), wb_ih, wb_hh, bb_ih, bb_hh), 0)
        x = jnp.concatenate([fwd, bwd], axis=-1)
    if reduction == 'sum':
        return x.sum(axis=0)
    return x.mean(axis=0)


# --------------------------------- main ---------------------------------------

if __name__ == "__main__":
    # Small shapes consistent with the module's forward: features (seq, batch, d_input).
    T, B = 8, 2
    d_input, d_hidden, n_lstm = 16, 32, 2

    key = jax.random.PRNGKey(0)
    k_feat, k_params = jax.random.split(key)
    features = jax.random.normal(k_feat, (T, B, d_input), dtype=jnp.float32)
    params = init_lstm_reduce_params(k_params, d_input, d_hidden, n_lstm)

    out_sum = jax.block_until_ready(lstm_reduce_forward(features, params, reduction='sum'))
    out_mean = jax.block_until_ready(lstm_reduce_forward(features, params, reduction='mean'))

    ref_sum = jax.block_until_ready(_ref_forward(features, params, reduction='sum'))
    ref_mean = jax.block_until_ready(_ref_forward(features, params, reduction='mean'))

    assert out_sum.shape == (B, d_hidden), out_sum.shape
    assert out_mean.shape == (B, d_hidden), out_mean.shape
    # Tolerance loosened vs the f32 reference because x/gx/W_ih/W_hh are bf16 MXU inputs
    # (f32 accumulation), per the perf review.
    np.testing.assert_allclose(np.asarray(out_sum), np.asarray(ref_sum), rtol=5e-2, atol=5e-2)
    np.testing.assert_allclose(np.asarray(out_mean), np.asarray(ref_mean), rtol=5e-2, atol=5e-2)

    print("KERNEL_OK")
</pallas_src>

<mosaic_0001>
module attributes {stable_mosaic.version = 11 : i64} {
  func.func @kernel(%arg0: i32, %arg1: i32, %arg2: memref<16x16xbf16, #tpu.memory_space<vmem>>, %arg3: memref<16x64xbf16, #tpu.memory_space<vmem>>, %arg4: memref<16x64xbf16, #tpu.memory_space<vmem>>, %arg5: memref<1x64xf32, #tpu.memory_space<vmem>>, %arg6: memref<1x64xf32, #tpu.memory_space<vmem>>, %arg7: memref<16x64xbf16, #tpu.memory_space<vmem>>, %arg8: memref<16x64xbf16, #tpu.memory_space<vmem>>) attributes {dimension_semantics = [#tpu.dimension_semantics<parallel>, #tpu.dimension_semantics<parallel>], iteration_bounds = array<i64: 1, 1>, scalar_prefetch = 0 : i64, scratch_operands = 0 : i64, tpu.core_type = #tpu.core_type<tc>, window_params = [{transform_indices = @transform_0, window_bounds = array<i64: 16, 16>}, {transform_indices = @transform_1, window_bounds = array<i64: 16, 64>}, {transform_indices = @transform_2, window_bounds = array<i64: 16, 64>}, {transform_indices = @transform_3, window_bounds = array<i64: 1, 64>}, {transform_indices = @transform_4, window_bounds = array<i64: 1, 64>}, {transform_indices = @transform_5, window_bounds = array<i64: 16, 64>}, {transform_indices = @transform_6, window_bounds = array<i64: 16, 64>}]} {
    %c0 = arith.constant 0 : index
    %c0_0 = arith.constant 0 : index
    %0 = vector.load %arg5[%c0, %c0_0] : memref<1x64xf32, #tpu.memory_space<vmem>>, vector<1x64xf32>
    %c0_1 = arith.constant 0 : index
    %c0_2 = arith.constant 0 : index
    %1 = vector.load %arg6[%c0_1, %c0_2] : memref<1x64xf32, #tpu.memory_space<vmem>>, vector<1x64xf32>
    %c0_3 = arith.constant 0 : index
    %c0_4 = arith.constant 0 : index
    %2 = vector.load %arg2[%c0_3, %c0_4] : memref<16x16xbf16, #tpu.memory_space<vmem>>, vector<16x16xbf16>
    %c0_5 = arith.constant 0 : index
    %c0_6 = arith.constant 0 : index
    %3 = vector.load %arg3[%c0_5, %c0_6] : memref<16x64xbf16, #tpu.memory_space<vmem>>, vector<16x64xbf16>
    %cst = arith.constant dense<0.000000e+00> : vector<16x64xf32>
    %4 = tpu.matmul %2, %3, %cst {dimension_numbers = #tpu.dot_dimension_numbers<[1], [0], [0], [1], [0, 0, 1, 1], [], []>} : vector<16x16xbf16>, vector<16x64xbf16>, vector<16x64xf32> -> vector<16x64xf32>
    %5 = vector.broadcast %0 : vector<1x64xf32> to vector<16x64xf32>
    %6 = arith.addf %5, %4 : vector<16x64xf32>
    %c0_7 = arith.constant 0 : index
    %c0_8 = arith.constant 0 : index
    %7 = vector.load %arg4[%c0_7, %c0_8] : memref<16x64xbf16, #tpu.memory_space<vmem>>, vector<16x64xbf16>
    %cst_9 = arith.constant dense<0.000000e+00> : vector<16x64xf32>
    %8 = tpu.matmul %2, %7, %cst_9 {dimension_numbers = #tpu.dot_dimension_numbers<[1], [0], [0], [1], [0, 0, 1, 1], [], []>} : vector<16x16xbf16>, vector<16x64xbf16>, vector<16x64xf32> -> vector<16x64xf32>
    %9 = vector.broadcast %1 : vector<1x64xf32> to vector<16x64xf32>
    %10 = arith.addf %9, %8 : vector<16x64xf32>
    %11 = arith.truncf %6 : vector<16x64xf32> to vector<16x64xbf16>
    %c0_10 = arith.constant 0 : index
    %c0_11 = arith.constant 0 : index
    %12 = vector.load %arg7[%c0_10, %c0_11] : memref<16x64xbf16, #tpu.memory_space<vmem>>, vector<16x64xbf16>
    tpu.vector_store %arg7[%c0_10, %c0_11], %11 {strides = array<i32>} : memref<16x64xbf16, #tpu.memory_space<vmem>>, vector<16x64xbf16>,
    %13 = arith.truncf %10 : vector<16x64xf32> to vector<16x64xbf16>
    %c0_12 = arith.constant 0 : index
    %c0_13 = arith.constant 0 : index
    %14 = vector.load %arg8[%c0_12, %c0_13] : memref<16x64xbf16, #tpu.memory_space<vmem>>, vector<16x64xbf16>
    tpu.vector_store %arg8[%c0_12, %c0_13], %13 {strides = array<i32>} : memref<16x64xbf16, #tpu.memory_space<vmem>>, vector<16x64xbf16>,
    return
  }
  func.func @transform_0(%arg0: i32, %arg1: i32) -> (i32, i32) {
    %c0_i32 = arith.constant 0 : i32
    %c0_i32_0 = arith.constant 0 : i32
    return %arg0, %c0_i32 : i32, i32
  }
  func.func @transform_1(%arg0: i32, %arg1: i32) -> (i32, i32) {
    %c0_i32 = arith.constant 0 : i32
    %c0_i32_0 = arith.constant 0 : i32
    return %c0_i32, %arg1 : i32, i32
  }
  func.func @transform_2(%arg0: i32, %arg1: i32) -> (i32, i32) {
    %c0_i32 = arith.constant 0 : i32
    %c0_i32_0 = arith.constant 0 : i32
    return %c0_i32, %arg1 : i32, i32
  }
  func.func @transform_3(%arg0: i32, %arg1: i32) -> (i32, i32) {
    %c0_i32 = arith.constant 0 : i32
    %c0_i32_0 = arith.constant 0 : i32
    return %c0_i32, %arg1 : i32, i32
  }
  func.func @transform_4(%arg0: i32, %arg1: i32) -> (i32, i32) {
    %c0_i32 = arith.constant 0 : i32
    %c0_i32_0 = arith.constant 0 : i32
    return %c0_i32, %arg1 : i32, i32
  }
  func.func @transform_5(%arg0: i32, %arg1: i32) -> (i32, i32) {
    %c0_i32 = arith.constant 0 : i32
    return %arg0, %arg1 : i32, i32
  }
  func.func @transform_6(%arg0: i32, %arg1: i32) -> (i32, i32) {
    %c0_i32 = arith.constant 0 : i32
    return %arg0, %arg1 : i32, i32
  }
}

</mosaic_0001>

<llo_original>
// kernel: tpu_custom_call.1
$region0: #{tpu_custom_call.1}
  #allocation0 [shape = 'u32[]', space=smem, size = 0x4, offset = 0x4, fixed_abs, tag = 'smem constant byte address 0x4 - core index']
  #allocation1 [shape = 'u32[144,128]{1,0:T(1,128)}', space=vmem, size = 0x12000, scoped, tag = 'internal scratch']
  %s0 = inlined_call_operand.hbm [shape: bf16[16,16], index: 0, kind: input, shape index: {}]
  %s1 = inlined_call_operand.hbm [shape: bf16[16,64], index: 1, kind: input, shape index: {}]
  %s2 = inlined_call_operand.hbm [shape: bf16[16,64], index: 2, kind: input, shape index: {}]
  %s3 = inlined_call_operand.vmem [shape: f32[1,64], index: 3, kind: input, shape index: {}]
  %s4 = inlined_call_operand.vmem [shape: f32[1,64], index: 4, kind: input, shape index: {}]
  %s5 = inlined_call_operand.hbm [shape: bf16[16,64], index: 5, kind: output, shape index: {0}]
  %s6 = inlined_call_operand.hbm [shape: bf16[16,64], index: 6, kind: output, shape index: {1}]
  %7 = xla_tuple %s5, %s6
  %s8 = sld [smem:[#allocation0]]
  $region50: #{tpu_custom_call.1} parent=0
    _
  %s10 = ssub.s32 1, %s8
  %s11 = scalar_select 0, %s10, %s8
  $region1: #{tpu_custom_call.1} parent=0
    #allocation2 [shape = 'u8[4096]{0}', space=vmem, size = 0x1000, scoped, tag = 'input window, operand 0, single buffered']
    #allocation3 [shape = 's32[1]{0}', space=sflag, size = 0x4, scoped, tag = 'scoped memory for tpu_custom_call.1']
    #allocation4 [shape = 's32[1]{0}', space=sflag, size = 0x4, scoped, tag = 'scoped memory for tpu_custom_call.1']
    #allocation5 [shape = 'u8[4096]{0}', space=vmem, size = 0x1000, scoped, tag = 'input window, operand 1, single buffered']
    #allocation6 [shape = 's32[1]{0}', space=sflag, size = 0x4, scoped, tag = 'scoped memory for tpu_custom_call.1']
    #allocation7 [shape = 'u8[4096]{0}', space=vmem, size = 0x1000, scoped, tag = 'input window, operand 2, single buffered']
    #allocation8 [shape = 'u8[4096]{0}', space=vmem, size = 0x1000, scoped, tag = 'output window, operand 0, single buffered']
    #allocation9 [shape = 'u8[4096]{0}', space=vmem, size = 0x1000, scoped, tag = 'output window, operand 1, single buffered']
    #allocation10 [shape = 's32[1]{0}', space=sflag, size = 0x4, scoped, tag = 'scoped memory for tpu_custom_call.1']
    %12 = vsyncpa [#allocation3], 0
    %13 = vsyncpa [#allocation6], 0
    %14 = vsyncpa [#allocation4], 0
    %15 = vsyncpa [#allocation10], 0
    // Predicated region
    $region2: #{tpu_custom_call.1} parent=1 // pred_check
      _
    $region3: #{tpu_custom_call.1} parent=1 // pred_check_branch
      %17 = sbr.rel (0) target = $region5
    $region4: #{tpu_custom_call.1} parent=1 // pred_region
      %s19 = ssub.s32 128, 128
      %20 = vsyncadd [#allocation3], %s19
      %s21 = sshll.u32 [#allocation2], 4
      %s22 = int_to_ptr.vmem [resolvable:$true] %s21
      %27 = dma.hbm_to_vmem [thread:$0]  %s0, 128, %s22, [#allocation3], 64, 64, 4
    $region5: #{tpu_custom_call.1} parent=1 // pred_fallthru
      _
    // Predicated region
    $region6: #{tpu_custom_call.1} parent=1 // pred_check
      _
    $region7: #{tpu_custom_call.1} parent=1 // pred_check_branch
      %29 = sbr.rel (0) target = $region9
    $region8: #{tpu_custom_call.1} parent=1 // pred_region
      %s31 = ssub.s32 128, 128
      %32 = vsyncadd [#allocation6], %s31
      %s33 = sshll.u32 [#allocation5], 4
      %s34 = int_to_ptr.vmem [resolvable:$true] %s33
      %39 = dma.hbm_to_vmem [thread:$0]  %s1, 128, %s34, [#allocation6], 64, 64, 4
    $region9: #{tpu_custom_call.1} parent=1 // pred_fallthru
      _
    // Predicated region
    $region10: #{tpu_custom_call.1} parent=1 // pred_check
      _
    $region11: #{tpu_custom_call.1} parent=1 // pred_check_branch
      %41 = sbr.rel (0) target = $region13
    $region12: #{tpu_custom_call.1} parent=1 // pred_region
      %s43 = ssub.s32 128, 128
      %44 = vsyncadd [#allocation6], %s43
      %s45 = sshll.u32 [#allocation7], 4
      %s46 = int_to_ptr.vmem [resolvable:$true] %s45
      %51 = dma.hbm_to_vmem [thread:$0]  %s2, 128, %s46, [#allocation6], 64, 64, 4
    $region13: #{tpu_custom_call.1} parent=1 // pred_fallthru
      _
    // Predicated region
    $region14: #{tpu_custom_call.1} parent=1 // pred_check
      _
    $region15: #{tpu_custom_call.1} parent=1 // pred_check_branch
      %53 = sbr.rel (0) target = $region17
    $region16: #{tpu_custom_call.1} parent=1 // pred_region
      _
    $region17: #{tpu_custom_call.1} parent=1 // pred_fallthru
      _
    // Predicated region
    $region18: #{tpu_custom_call.1} parent=1 // pred_check
      _
    $region19: #{tpu_custom_call.1} parent=1 // pred_check_branch
      %55 = sbr.rel (0) target = $region21
    $region20: #{tpu_custom_call.1} parent=1 // pred_region
      _
    $region21: #{tpu_custom_call.1} parent=1 // pred_fallthru
      _
    // Predicated region
    $region22: #{tpu_custom_call.1} parent=1 // pred_check
      _
    $region23: #{tpu_custom_call.1} parent=1 // pred_check_branch
      %57 = sbr.rel (0) target = $region25
    $region24: #{tpu_custom_call.1} parent=1 // pred_region
      %58 = dma.done [#allocation3], 128
    $region25: #{tpu_custom_call.1} parent=1 // pred_fallthru
      _
    // Predicated region
    $region26: #{tpu_custom_call.1} parent=1 // pred_check
      _
    $region27: #{tpu_custom_call.1} parent=1 // pred_check_branch
      %60 = sbr.rel (0) target = $region29
    $region28: #{tpu_custom_call.1} parent=1 // pred_region
      %61 = dma.done [#allocation6], 128
    $region29: #{tpu_custom_call.1} parent=1 // pred_fallthru
      _
    // Predicated region
    $region30: #{tpu_custom_call.1} parent=1 // pred_check
      _
    $region31: #{tpu_custom_call.1} parent=1 // pred_check_branch
      %63 = sbr.rel (0) target = $region33
    $region32: #{tpu_custom_call.1} parent=1 // pred_region
      %64 = dma.done [#allocation6], 128
    $region33: #{tpu_custom_call.1} parent=1 // pred_fallthru
      _
    %v66 = vld [vmem:[%s3] sm:$0x1]
    %v67 = vld [vmem:[%s4] sm:$0x1]
    %v68 = vld [vmem:[#allocation2] sm:$0xf]
    %v69 = vld [vmem:[#allocation2 + $0x4] sm:$0xf]
    %v70 = vld [vmem:[#allocation5] sm:$0xf]
    %v71 = vld [vmem:[#allocation5 + $0x4] sm:$0xf]
    %v74 = vunpack.c.l.b16 %v68
    %v75 = vunpack.c.l.b16 %v69
    %v76 = vpack.c.b16 %v75, %v74
    %v79 = vunpack.c.l.b16 %v70
    %v80 = vunpack.c.l.b16 %v71
    %v81 = vpack.c.b16 %v80, %v79
    %vm83 = vcmask 130048
    %v85 = vsel %vm83, %v76, 0
    %87 = vmatprep.subr.bf16.mxu0 0
    %88 = vmatpush1.bf16.msra.mxu0 0
    %89 = vmatprep.subr.bf16.mxu0 0
    %90 = vmatpush1.bf16.msra.mxu0 0
    %91 = vmatprep.subr.bf16.mxu0 0
    %92 = vmatpush1.bf16.msra.mxu0 0
    %93 = vmatprep.subr.bf16.mxu0 0
    %94 = vmatpush1.bf16.msra.mxu0 0
    %95 = vmatprep.subr.bf16.mxu0 0
    %96 = vmatpush1.bf16.msra.mxu0 0
    %97 = vmatprep.subr.bf16.mxu0 0
    %98 = vmatpush1.bf16.msra.mxu0 0
    %99 = vmatprep.subr.bf16.mxu0 0
    %100 = vmatpush1.bf16.msra.mxu0 0
    %101 = vmatprep.subr.bf16.mxu0 0
    %102 = vmatpush1.bf16.msra.mxu0 %v81
    %103 = vmatprep.subr.bf16.mxu0 0
    %104 = vmatpush2.bf16.msra.mxu0 0
    %105 = vmatprep.subr.bf16.mxu0 0
    %106 = vmatpush2.bf16.msra.mxu0 0
    %107 = vmatprep.subr.bf16.mxu0 0
    %108 = vmatpush2.bf16.msra.mxu0 0
    %109 = vmatprep.subr.bf16.mxu0 0
    %110 = vmatpush2.bf16.msra.mxu0 0
    %111 = vmatprep.subr.bf16.mxu0 0
    %112 = vmatpush2.bf16.msra.mxu0 0
    %113 = vmatprep.subr.bf16.mxu0 0
    %114 = vmatpush2.bf16.msra.mxu0 0
    %115 = vmatprep.subr.bf16.mxu0 0
    %116 = vmatpush2.bf16.msra.mxu0 0
    %117 = vmatprep.subr.bf16.mxu0 0
    %118 = vmatpush2.bf16.msra.mxu0 0
    %119 = vmatprep.mubr.bf16.mxu0 0
    %120 = vmatmul.mubr.bf16.gmra.mxu0 %v85
    %v121 = vpop.f32.mrf.mxu0
    %v122 = vadd.f32 0.0, %v121
    %v123 = vpop.f32.mrf.mxu0
    %v124 = vpop.f32.mrf.mxu0
    %v125 = vadd.f32 0.0, %v124
    %v126 = vpop.f32.mrf.mxu0
    %127 = vdwg.mxu0
    %v129 = vlaneseq
    %v130 = vshrl.u32 %v129, 7
    %v131 = vsub.s32 0, %v130
    %v132 = vrot.slane %v66, %v131
    %v134 = vadd.f32 %v132, %v122
    %v135 = vadd.f32 %v132, %v125
    %v136 = vld [vmem:[#allocation7] sm:$0xf]
    %v137 = vld [vmem:[#allocation7 + $0x4] sm:$0xf]
    %v140 = vunpack.c.l.b16 %v136
    %v141 = vunpack.c.l.b16 %v137
    %v142 = vpack.c.b16 %v141, %v140
    %144 = vmatprep.subr.bf16.mxu0 0
    %145 = vmatpush1.bf16.msra.mxu0 0
    %146 = vmatprep.subr.bf16.mxu0 0
    %147 = vmatpush1.bf16.msra.mxu0 0
    %148 = vmatprep.subr.bf16.mxu0 0
    %149 = vmatpush1.bf16.msra.mxu0 0
    %150 = vmatprep.subr.bf16.mxu0 0
    %151 = vmatpush1.bf16.msra.mxu0 0
    %152 = vmatprep.subr.bf16.mxu0 0
    %153 = vmatpush1.bf16.msra.mxu0 0
    %154 = vmatprep.subr.bf16.mxu0 0
    %155 = vmatpush1.bf16.msra.mxu0 0
    %156 = vmatprep.subr.bf16.mxu0 0
    %157 = vmatpush1.bf16.msra.mxu0 0
    %158 = vmatprep.subr.bf16.mxu0 0
    %159 = vmatpush1.bf16.msra.mxu0 %v142
    %160 = vmatprep.subr.bf16.mxu0 0
    %161 = vmatpush2.bf16.msra.mxu0 0
    %162 = vmatprep.subr.bf16.mxu0 0
    %163 = vmatpush2.bf16.msra.mxu0 0
    %164 = vmatprep.subr.bf16.mxu0 0
    %165 = vmatpush2.bf16.msra.mxu0 0
    %166 = vmatprep.subr.bf16.mxu0 0
    %167 = vmatpush2.bf16.msra.mxu0 0
    %168 = vmatprep.subr.bf16.mxu0 0
    %169 = vmatpush2.bf16.msra.mxu0 0
    %170 = vmatprep.subr.bf16.mxu0 0
    %171 = vmatpush2.bf16.msra.mxu0 0
    %172 = vmatprep.subr.bf16.mxu0 0
    %173 = vmatpush2.bf16.msra.mxu0 0
    %174 = vmatprep.subr.bf16.mxu0 0
    %175 = vmatpush2.bf16.msra.mxu0 0
    %176 = vmatprep.mubr.bf16.mxu0 0
    %177 = vmatmul.mubr.bf16.gmra.mxu0 %v85
    %v178 = vpop.f32.mrf.mxu0
    %v179 = vadd.f32 0.0, %v178
    %v180 = vpop.f32.mrf.mxu0
    %v181 = vpop.f32.mrf.mxu0
    %v182 = vadd.f32 0.0, %v181
    %v183 = vpop.f32.mrf.mxu0
    %184 = vdwg.mxu0
    %v186 = vlaneseq
    %v187 = vshrl.u32 %v186, 7
    %v188 = vsub.s32 0, %v187
    %v189 = vrot.slane %v67, %v188
    %v191 = vadd.f32 %v189, %v179
    %v192 = vadd.f32 %v189, %v182
    %v193 = vpack.c.bf16 %v135, %v134
    %v195 = vunpack.c.l.b16 %v193
    %v196 = vunpack.c.h.b16 %v193
    %v197 = vpack.c.b16 %v195, %v195
    %v198 = vpack.c.b16 %v196, %v196
    %vm201 = vcmask 519168
    %202 = vst.msk [vmem:[#allocation8] sm:$0xf] %vm201, %v197
    %203 = vst.msk [vmem:[#allocation8 + $0x4] sm:$0xf] %vm201, %v198
    %v204 = vpack.c.bf16 %v192, %v191
    %v206 = vunpack.c.l.b16 %v204
    %v207 = vunpack.c.h.b16 %v204
    %v208 = vpack.c.b16 %v206, %v206
    %v209 = vpack.c.b16 %v207, %v207
    %212 = vst.msk [vmem:[#allocation9] sm:$0xf] %vm201, %v208
    %213 = vst.msk [vmem:[#allocation9 + $0x4] sm:$0xf] %vm201, %v209
    // Predicated region
    $region34: #{tpu_custom_call.1} parent=1 // pred_check
      _
    $region35: #{tpu_custom_call.1} parent=1 // pred_check_branch
      %215 = sbr.rel (0) target = $region37
    $region36: #{tpu_custom_call.1} parent=1 // pred_region
      %s217 = ssub.s32 128, 128
      %218 = vsyncadd [#allocation4], %s217
      %s219 = sshll.u32 [#allocation8], 4
      %s220 = int_to_ptr.vmem [resolvable:$true] %s219
      %225 = dma.vmem_to_hbm [thread:$0]  %s220, 128, %s5, [#allocation4], 64, 64, 4
    $region37: #{tpu_custom_call.1} parent=1 // pred_fallthru
      _
    // Predicated region
    $region38: #{tpu_custom_call.1} parent=1 // pred_check
      _
    $region39: #{tpu_custom_call.1} parent=1 // pred_check_branch
      %227 = sbr.rel (0) target = $region41
    $region40: #{tpu_custom_call.1} parent=1 // pred_region
      %s229 = ssub.s32 128, 128
      %230 = vsyncadd [#allocation10], %s229
      %s231 = sshll.u32 [#allocation9], 4
      %s232 = int_to_ptr.vmem [resolvable:$true] %s231
      %237 = dma.vmem_to_hbm [thread:$0]  %s232, 128, %s6, [#allocation10], 64, 64, 4
    $region41: #{tpu_custom_call.1} parent=1 // pred_fallthru
      _
    // Predicated region
    $region42: #{tpu_custom_call.1} parent=1 // pred_check
      _
    $region43: #{tpu_custom_call.1} parent=1 // pred_check_branch
      %239 = sbr.rel (0) target = $region45
    $region44: #{tpu_custom_call.1} parent=1 // pred_region
      %240 = dma.done [#allocation4], 128
    $region45: #{tpu_custom_call.1} parent=1 // pred_fallthru
      _
    // Predicated region
    $region46: #{tpu_custom_call.1} parent=1 // pred_check
      _
    $region47: #{tpu_custom_call.1} parent=1 // pred_check_branch
      %242 = sbr.rel (0) target = $region49
    $region48: #{tpu_custom_call.1} parent=1 // pred_region
      %243 = dma.done [#allocation10], 128
    $region49: #{tpu_custom_call.1} parent=1 // pred_fallthru
      _
    %244 = vsyncpa [#allocation3], 1
    %245 = vsyncpa [#allocation6], 1
    %246 = vsyncpa [#allocation4], 1
    %247 = vsyncpa [#allocation10], 1

</llo_original>
